<compile_context>
chip_gen: v7x
topology: tpu7x:2x2x1
jax: 0.10.0
libtpu: 0.0.40
codegen_flags: <defaults>
</compile_context>

<pallas_src>
import functools

import jax
import jax.numpy as jnp
from jax.experimental import pallas as pl
from jax.experimental.pallas import tpu as pltpu


def _round_up(x, m):
    return -(-x // m) * m


def _deconv_assoc_kernel(h_ref, rsel_ref, wf_ref, bf_ref, wh_ref, bh_ref,
                         feat_ref, hid_ref, *, node_count):
    """max_unpool2d(kernel=(K,1)) + two-head linear on an (Nb, Hb) block."""
    Nb, Hb, W = h_ref.shape
    K = node_count
    Fd = feat_ref.shape[-1]
    Hd = hid_ref.shape[-1]

    h = h_ref[...]        # (Nb, Hb, W) f32
    r_sel = rsel_ref[...]  # (Nb, Hb, W) i32  (within-window row of the pooled max, per column)

    # Gather-style unpool: unpooled row (i*K + r) gets h[i, :] where r_sel[i, :] == r, else 0.
    # (Kept as a 4-D select + leading-dim reshape: a sublane repeat to build the merged
    #  row axis directly would itself require a relayout; this copy is on the small
    #  pre-matmul W-wide operand, not the wide output.)
    r_iota = jax.lax.broadcasted_iota(jnp.int32, (Nb, Hb, K, W), 2)
    keep = r_sel[:, :, None, :] == r_iota
    unpooled = (jnp.where(keep, h[:, :, None, :], 0.0)
                .astype(jnp.bfloat16)                 # bf16 MXU LHS
                .reshape(Nb * Hb * K, W))

    # Two separate heads (no fused/padded RHS): no pad-column stores, no wrapper slicing,
    # and the EUP tanh only runs on the hidden head's columns.
    yf = jnp.dot(unpooled, wf_ref[...], preferred_element_type=jnp.float32) + bf_ref[...]
    yh = jnp.dot(unpooled, wh_ref[...], preferred_element_type=jnp.float32) + bh_ref[...]

    feat_ref[...] = jnp.maximum(yf, 0.0).reshape(Nb, Hb * K, Fd)
    hid_ref[...] = jnp.tanh(yh).reshape(Nb, Hb * K, Hd)


def _assoc_only_kernel(h_ref, wf_ref, bf_ref, wh_ref, bh_ref, feat_ref, hid_ref):
    """node_count <= 0 path: unpool is a no-op -> just the two-head linear layer."""
    Nb, Hb, W = h_ref.shape
    Fd = feat_ref.shape[-1]
    Hd = hid_ref.shape[-1]
    lhs = h_ref[...].astype(jnp.bfloat16).reshape(Nb * Hb, W)
    yf = jnp.dot(lhs, wf_ref[...], preferred_element_type=jnp.float32) + bf_ref[...]
    yh = jnp.dot(lhs, wh_ref[...], preferred_element_type=jnp.float32) + bh_ref[...]
    feat_ref[...] = jnp.maximum(yf, 0.0).reshape(Nb, Hb, Fd)
    hid_ref[...] = jnp.tanh(yh).reshape(Nb, Hb, Hd)


def _vmem_limit_bytes():
    """Scoped-VMEM limit per chip generation (v5e/v6e: 128 MiB physical, v7x: 64 MiB)."""
    default = 32 << 20
    try:
        cap = getattr(pltpu.get_tpu_info(), "vmem_capacity_bytes", None)
    except Exception:
        return default
    if cap is None:
        return default
    if cap >= (128 << 20):
        return 96 << 20     # v5e / v6e: raise the scoped limit -> bigger blocks
    return 32 << 20         # v7x: only 64 MiB physical per TC -> stay conservative


def _pick_blocks(N, H, W, K, Fd, Hd, budget_bytes, min_steps=8):
    """Pick (Nb, Hb) block sizes.

    Lane/sublane-padding-aware VMEM accounting (W/Fd/Hd rounded up to 128 lanes, sublane
    dims to 8, weight double-buffers included).  Prefers >= min_steps total grid steps
    (pipeline depth: >= 3-4 steps per v7x TensorCore) and, among those, the largest block
    that fits the budget (amortizes the ~0.35 us per-grid-step overhead).
    """
    Wp = _round_up(W, 128)
    Dp = _round_up(Fd, 128) + _round_up(Hd, 128)

    def block_bytes(nb, hb):
        hbp = _round_up(hb, 8)
        hkp = _round_up(hb * K, 8)
        inputs = 2 * 2 * 4 * hbp * Wp           # h (f32) + r_sel (i32), double-buffered
        unpool = 3 * 4 * hkp * Wp               # keep / where / reshaped-LHS temporaries
        matres = 2 * 4 * hkp * Dp               # f32 matmul results + activated values
        outs = 2 * 4 * hkp * Dp                 # two f32 output blocks, double-buffered
        weights = 2 * 2 * _round_up(W, 8) * Dp  # bf16 weights, double-buffered
        biases = 2 * 4 * 8 * Dp                 # f32 biases (sublane-padded)
        return nb * (inputs + unpool + matres + outs) + weights + biases

    n_divs = [d for d in range(1, N + 1) if N % d == 0]
    # Hb must either equal H or be a multiple of 8 dividing H (the (8,128) tile rule).
    h_divs = sorted({H} | {d for d in range(8, H, 8) if H % d == 0})

    candidates = []
    for nb in n_divs:
        for hb in h_divs:
            if block_bytes(nb, hb) <= budget_bytes:
                steps = (N // nb) * (H // hb)
                candidates.append((nb, hb, steps))
    if not candidates:
        return 1, min(h_divs)   # smallest legal block
    nb, hb, _ = max(candidates, key=lambda c: (min(c[2], min_steps), c[0] * c[1]))
    return nb, hb


def deconv_association_forward(h, indices, node_count, wf, bf, wh, bh, root=False):
    """Mirrors DeconvolutionalAssociationLayer.forward for the root=False path.

    Contract: `indices` must come from a non-overlapping max_pool2d with
    kernel_size=(node_count, 1), stride=(node_count, 1), i.e.
    indices[n, i, j] = (i*node_count + r)*W + j with r in [0, node_count).
    """
    if root:
        # TODO(synk): root path (A_c = [None]*len(nodes), h passed through untouched) is
        # host-side control flow around the injected `layer`; not kernelized here.
        raise NotImplementedError("root=True path not kernelized")

    N, H, W = h.shape
    Fd = wf.shape[1]
    Hd = wh.shape[1]

    h = h.astype(jnp.float32)
    wf_b = wf.astype(jnp.bfloat16)           # bf16 MXU weights
    wh_b = wh.astype(jnp.bfloat16)
    bf_f = bf.reshape(1, Fd).astype(jnp.float32)
    bh_f = bh.reshape(1, Hd).astype(jnp.float32)

    vmem_limit = _vmem_limit_bytes()
    budget = (vmem_limit * 3) // 4           # leave headroom for compiler scratch

    compiler_params = pltpu.CompilerParams(
        dimension_semantics=("parallel", "parallel"),
        vmem_limit_bytes=vmem_limit,
    )

    if node_count <= 0:
        # No unpooling -> dedicated matmul-only kernel (no index DMA, no mask/select).
        Nb, Hb = _pick_blocks(N, H, W, 1, Fd, Hd, budget)
        feat, hid = pl.pallas_call(
            _assoc_only_kernel,
            out_shape=(jax.ShapeDtypeStruct((N, H, Fd), jnp.float32),
                       jax.ShapeDtypeStruct((N, H, Hd), jnp.float32)),
            grid_spec=pltpu.PrefetchScalarGridSpec(
                num_scalar_prefetch=0,
                grid=(N // Nb, H // Hb),
                in_specs=[
                    pl.BlockSpec((Nb, Hb, W), lambda n, hh: (n, hh, 0)),   # h
                    pl.BlockSpec((W, Fd), lambda n, hh: (0, 0)),           # wf (resident)
                    pl.BlockSpec((1, Fd), lambda n, hh: (0, 0)),           # bf (resident)
                    pl.BlockSpec((W, Hd), lambda n, hh: (0, 0)),           # wh (resident)
                    pl.BlockSpec((1, Hd), lambda n, hh: (0, 0)),           # bh (resident)
                ],
                out_specs=[
                    pl.BlockSpec((Nb, Hb, Fd), lambda n, hh: (n, hh, 0)),
                    pl.BlockSpec((Nb, Hb, Hd), lambda n, hh: (n, hh, 0)),
                ],
            ),
            compiler_params=compiler_params,
        )(h, wf_b, bf_f, wh_b, bh_f)
        return feat, hid

    K = node_count
    H_out = H * K

    # Precompute the within-window residue in the wrapper: removes the per-element
    # integer divide/modulo from the kernel's hot path at identical DMA cost.
    r_sel = (indices.astype(jnp.int32) // W) % K

    Nb, Hb = _pick_blocks(N, H, W, K, Fd, Hd, budget)
    kernel = functools.partial(_deconv_assoc_kernel, node_count=K)

    feat, hid = pl.pallas_call(
        kernel,
        out_shape=(jax.ShapeDtypeStruct((N, H_out, Fd), jnp.float32),
                   jax.ShapeDtypeStruct((N, H_out, Hd), jnp.float32)),
        grid_spec=pltpu.PrefetchScalarGridSpec(
            num_scalar_prefetch=0,
            grid=(N // Nb, H // Hb),
            in_specs=[
                pl.BlockSpec((Nb, Hb, W), lambda n, hh: (n, hh, 0)),   # h
                pl.BlockSpec((Nb, Hb, W), lambda n, hh: (n, hh, 0)),   # r_sel
                pl.BlockSpec((W, Fd), lambda n, hh: (0, 0)),           # wf (resident)
                pl.BlockSpec((1, Fd), lambda n, hh: (0, 0)),           # bf (resident)
                pl.BlockSpec((W, Hd), lambda n, hh: (0, 0)),           # wh (resident)
                pl.BlockSpec((1, Hd), lambda n, hh: (0, 0)),           # bh (resident)
            ],
            out_specs=[
                pl.BlockSpec((Nb, Hb * K, Fd), lambda n, hh: (n, hh, 0)),
                pl.BlockSpec((Nb, Hb * K, Hd), lambda n, hh: (n, hh, 0)),
            ],
        ),
        compiler_params=compiler_params,
    )(h, r_sel, wf_b, bf_f, wh_b, bh_f)

    return feat, hid


def _reference(h, indices, K, wf, bf, wh, bh):
    """Pure-JAX reference: true scatter unpool + two linear heads (all f32)."""
    N, H, W = h.shape
    H_out = H * K
    out = jnp.zeros((N, H_out * W), jnp.float32)
    out = out.at[jnp.arange(N)[:, None], indices.reshape(N, -1)].set(h.reshape(N, -1))
    unpooled = out.reshape(N, H_out, W)
    feat = jnp.maximum(unpooled @ wf + bf, 0.0)
    hid = jnp.tanh(unpooled @ wh + bh)
    return feat, hid


if __name__ == "__main__":
    # Small deterministic shapes consistent with the module's forward:
    #   batch N=2, pooled rows H=8, width W=16, node_count (children per node) K=4.
    N, H, W, K = 2, 8, 16, 4
    Fd, Hd = 32, 32

    key = jax.random.PRNGKey(0)
    k_h, k_r, k_wf, k_bf, k_wh, k_bh = jax.random.split(key, 6)

    h = jax.random.normal(k_h, (N, H, W), jnp.float32)

    # Indices as produced by max_pool2d(kernel=(K,1), stride=(K,1), return_indices=True):
    # flat index into the (H*K, W) plane, inside the window of each pooled element.
    r = jax.random.randint(k_r, (N, H, W), 0, K)
    i_idx = jnp.arange(H)[None, :, None]
    j_idx = jnp.arange(W)[None, None, :]
    indices = ((i_idx * K + r) * W + j_idx).astype(jnp.int32)

    # Deterministic synthetic parameters for the inner association layer.
    wf = jax.random.normal(k_wf, (W, Fd), jnp.float32) * 0.1
    bf = jax.random.normal(k_bf, (1, Fd), jnp.float32) * 0.1
    wh = jax.random.normal(k_wh, (W, Hd), jnp.float32) * 0.1
    bh = jax.random.normal(k_bh, (1, Hd), jnp.float32) * 0.1

    # Main path: unpool + two-head linear.
    feat, hid = deconv_association_forward(h, indices, K, wf, bf, wh, bh, root=False)
    feat, hid = jax.block_until_ready((feat, hid))

    feat_ref, hid_ref = _reference(h, indices, K, wf, bf, wh, bh)
    assert feat.shape == (N, H * K, Fd) and hid.shape == (N, H * K, Hd)
    # bf16 MXU operands -> relaxed tolerance vs the pure-f32 reference.
    assert jnp.allclose(feat, feat_ref, atol=5e-2, rtol=5e-2)
    assert jnp.allclose(hid, hid_ref, atol=5e-2, rtol=5e-2)

    # node_count <= 0 path: unpool is a no-op, dedicated matmul-only kernel.
    feat0, hid0 = deconv_association_forward(h, None, 0, wf, bf, wh, bh, root=False)
    feat0, hid0 = jax.block_until_ready((feat0, hid0))
    feat0_ref = jnp.maximum(h @ wf + bf, 0.0)
    hid0_ref = jnp.tanh(h @ wh + bh)
    assert jnp.allclose(feat0, feat0_ref, atol=5e-2, rtol=5e-2)
    assert jnp.allclose(hid0, hid0_ref, atol=5e-2, rtol=5e-2)

    print("KERNEL_OK")
</pallas_src>

<mosaic_0001>
module attributes {stable_mosaic.version = 11 : i64} {
  func.func @_deconv_assoc_kernel(%arg0: i32, %arg1: i32, %arg2: memref<1x8x16xf32, #tpu.memory_space<vmem>>, %arg3: memref<1x8x16xi32, #tpu.memory_space<vmem>>, %arg4: memref<16x32xbf16, #tpu.memory_space<vmem>>, %arg5: memref<1x32xf32, #tpu.memory_space<vmem>>, %arg6: memref<16x32xbf16, #tpu.memory_space<vmem>>, %arg7: memref<1x32xf32, #tpu.memory_space<vmem>>, %arg8: memref<1x32x32xf32, #tpu.memory_space<vmem>>, %arg9: memref<1x32x32xf32, #tpu.memory_space<vmem>>) attributes {dimension_semantics = [#tpu.dimension_semantics<parallel>, #tpu.dimension_semantics<parallel>], iteration_bounds = array<i64: 2, 1>, scalar_prefetch = 0 : i64, scratch_operands = 0 : i64, tpu.core_type = #tpu.core_type<tc>, window_params = [{transform_indices = @transform_0, window_bounds = array<i64: 1, 8, 16>}, {transform_indices = @transform_1, window_bounds = array<i64: 1, 8, 16>}, {pipeline_mode = #tpu.pipeline_mode<synchronous>, transform_indices = @transform_2, window_bounds = array<i64: 16, 32>}, {pipeline_mode = #tpu.pipeline_mode<synchronous>, transform_indices = @transform_3, window_bounds = array<i64: 1, 32>}, {pipeline_mode = #tpu.pipeline_mode<synchronous>, transform_indices = @transform_4, window_bounds = array<i64: 16, 32>}, {pipeline_mode = #tpu.pipeline_mode<synchronous>, transform_indices = @transform_5, window_bounds = array<i64: 1, 32>}, {transform_indices = @transform_6, window_bounds = array<i64: 1, 32, 32>}, {transform_indices = @transform_7, window_bounds = array<i64: 1, 32, 32>}]} {
    %c0 = arith.constant 0 : index
    %c0_0 = arith.constant 0 : index
    %c0_1 = arith.constant 0 : index
    %0 = vector.load %arg2[%c0, %c0_0, %c0_1] : memref<1x8x16xf32, #tpu.memory_space<vmem>>, vector<1x8x16xf32>
    %c0_2 = arith.constant 0 : index
    %c0_3 = arith.constant 0 : index
    %c0_4 = arith.constant 0 : index
    %1 = vector.load %arg3[%c0_2, %c0_3, %c0_4] : memref<1x8x16xi32, #tpu.memory_space<vmem>>, vector<1x8x16xi32>
    %2 = tpu.iota {dimensions = array<i32: 2>} : vector<1x8x4x16xi32>
    %3 = vector.shape_cast %1 : vector<1x8x16xi32> to vector<1x8x1x16xi32>
    %4 = vector.broadcast %3 : vector<1x8x1x16xi32> to vector<1x8x4x16xi32>
    %5 = arith.cmpi eq, %4, %2 : vector<1x8x4x16xi32>
    %6 = vector.shape_cast %0 : vector<1x8x16xf32> to vector<1x8x1x16xf32>
    %cst = arith.constant 0.000000e+00 : f32
    %7 = vector.shape_cast %6 : vector<1x8x1x16xf32> to vector<1x8x1x16xf32>
    %8 = vector.broadcast %7 : vector<1x8x1x16xf32> to vector<1x8x4x16xf32>
    %9 = vector.broadcast %cst : f32 to vector<1x8x4x16xf32>
    %10 = arith.select %5, %8, %9 : vector<1x8x4x16xi1>, vector<1x8x4x16xf32>
    %11 = arith.truncf %10 : vector<1x8x4x16xf32> to vector<1x8x4x16xbf16>
    %12 = vector.shape_cast %11 : vector<1x8x4x16xbf16> to vector<32x16xbf16>
    %c0_5 = arith.constant 0 : index
    %c0_6 = arith.constant 0 : index
    %13 = vector.load %arg4[%c0_5, %c0_6] : memref<16x32xbf16, #tpu.memory_space<vmem>>, vector<16x32xbf16>
    %cst_7 = arith.constant dense<0.000000e+00> : vector<32x32xf32>
    %14 = tpu.matmul %12, %13, %cst_7 {dimension_numbers = #tpu.dot_dimension_numbers<[1], [0], [0], [1], [0, 0, 1, 1], [], []>} : vector<32x16xbf16>, vector<16x32xbf16>, vector<32x32xf32> -> vector<32x32xf32>
    %c0_8 = arith.constant 0 : index
    %c0_9 = arith.constant 0 : index
    %15 = vector.load %arg5[%c0_8, %c0_9] : memref<1x32xf32, #tpu.memory_space<vmem>>, vector<1x32xf32>
    %16 = vector.broadcast %15 : vector<1x32xf32> to vector<32x32xf32>
    %17 = arith.addf %14, %16 : vector<32x32xf32>
    %c0_10 = arith.constant 0 : index
    %c0_11 = arith.constant 0 : index
    %18 = vector.load %arg6[%c0_10, %c0_11] : memref<16x32xbf16, #tpu.memory_space<vmem>>, vector<16x32xbf16>
    %cst_12 = arith.constant dense<0.000000e+00> : vector<32x32xf32>
    %19 = tpu.matmul %12, %18, %cst_12 {dimension_numbers = #tpu.dot_dimension_numbers<[1], [0], [0], [1], [0, 0, 1, 1], [], []>} : vector<32x16xbf16>, vector<16x32xbf16>, vector<32x32xf32> -> vector<32x32xf32>
    %c0_13 = arith.constant 0 : index
    %c0_14 = arith.constant 0 : index
    %20 = vector.load %arg7[%c0_13, %c0_14] : memref<1x32xf32, #tpu.memory_space<vmem>>, vector<1x32xf32>
    %21 = vector.broadcast %20 : vector<1x32xf32> to vector<32x32xf32>
    %22 = arith.addf %19, %21 : vector<32x32xf32>
    %cst_15 = arith.constant 0.000000e+00 : f32
    %23 = vector.broadcast %cst_15 : f32 to vector<32x32xf32>
    %24 = arith.maximumf %17, %23 : vector<32x32xf32>
    %25 = vector.shape_cast %24 : vector<32x32xf32> to vector<1x32x32xf32>
    %c0_16 = arith.constant 0 : index
    %c0_17 = arith.constant 0 : index
    %c0_18 = arith.constant 0 : index
    %26 = vector.load %arg8[%c0_16, %c0_17, %c0_18] : memref<1x32x32xf32, #tpu.memory_space<vmem>>, vector<1x32x32xf32>
    tpu.vector_store %arg8[%c0_16, %c0_17, %c0_18], %25 {strides = array<i32>} : memref<1x32x32xf32, #tpu.memory_space<vmem>>, vector<1x32x32xf32>,
    %27 = math.tanh %22 : vector<32x32xf32>
    %28 = vector.shape_cast %27 : vector<32x32xf32> to vector<1x32x32xf32>
    %c0_19 = arith.constant 0 : index
    %c0_20 = arith.constant 0 : index
    %c0_21 = arith.constant 0 : index
    %29 = vector.load %arg9[%c0_19, %c0_20, %c0_21] : memref<1x32x32xf32, #tpu.memory_space<vmem>>, vector<1x32x32xf32>
    tpu.vector_store %arg9[%c0_19, %c0_20, %c0_21], %28 {strides = array<i32>} : memref<1x32x32xf32, #tpu.memory_space<vmem>>, vector<1x32x32xf32>,
    return
  }
  func.func @transform_0(%arg0: i32, %arg1: i32) -> (i32, i32, i32) {
    %c0_i32 = arith.constant 0 : i32
    %c0_i32_0 = arith.constant 0 : i32
    return %arg0, %arg1, %c0_i32 : i32, i32, i32
  }
  func.func @transform_1(%arg0: i32, %arg1: i32) -> (i32, i32, i32) {
    %c0_i32 = arith.constant 0 : i32
    %c0_i32_0 = arith.constant 0 : i32
    return %arg0, %arg1, %c0_i32 : i32, i32, i32
  }
  func.func @transform_2(%arg0: i32, %arg1: i32) -> (i32, i32) {
    %c0_i32 = arith.constant 0 : i32
    %c0_i32_0 = arith.constant 0 : i32
    %c0_i32_1 = arith.constant 0 : i32
    return %c0_i32, %c0_i32_0 : i32, i32
  }
  func.func @transform_3(%arg0: i32, %arg1: i32) -> (i32, i32) {
    %c0_i32 = arith.constant 0 : i32
    %c0_i32_0 = arith.constant 0 : i32
    %c0_i32_1 = arith.constant 0 : i32
    return %c0_i32, %c0_i32_0 : i32, i32
  }
  func.func @transform_4(%arg0: i32, %arg1: i32) -> (i32, i32) {
    %c0_i32 = arith.constant 0 : i32
    %c0_i32_0 = arith.constant 0 : i32
    %c0_i32_1 = arith.constant 0 : i32
    return %c0_i32, %c0_i32_0 : i32, i32
  }
  func.func @transform_5(%arg0: i32, %arg1: i32) -> (i32, i32) {
    %c0_i32 = arith.constant 0 : i32
    %c0_i32_0 = arith.constant 0 : i32
    %c0_i32_1 = arith.constant 0 : i32
    return %c0_i32, %c0_i32_0 : i32, i32
  }
  func.func @transform_6(%arg0: i32, %arg1: i32) -> (i32, i32, i32) {
    %c0_i32 = arith.constant 0 : i32
    %c0_i32_0 = arith.constant 0 : i32
    return %arg0, %arg1, %c0_i32 : i32, i32, i32
  }
  func.func @transform_7(%arg0: i32, %arg1: i32) -> (i32, i32, i32) {
    %c0_i32 = arith.constant 0 : i32
    %c0_i32_0 = arith.constant 0 : i32
    return %arg0, %arg1, %c0_i32 : i32, i32, i32
  }
}

</mosaic_0001>

<llo_original>
// kernel: tpu_custom_call.1
$region0: #{tpu_custom_call.1}
  #allocation0 [shape = 'u32[]', space=smem, size = 0x4, offset = 0x4, fixed_abs, tag = 'smem constant byte address 0x4 - core index']
  #allocation1 [shape = 'u32[144,128]{1,0:T(1,128)}', space=vmem, size = 0x12000, scoped, tag = 'internal scratch']
  %s0 = inlined_call_operand.hbm [shape: f32[2,8,16], index: 0, kind: input, shape index: {}]
  %s1 = inlined_call_operand.hbm [shape: s32[2,8,16], index: 1, kind: input, shape index: {}]
  %s2 = inlined_call_operand.hbm [shape: bf16[16,32], index: 2, kind: input, shape index: {}]
  %s3 = inlined_call_operand.vmem [shape: f32[1,32], index: 3, kind: input, shape index: {}]
  %s4 = inlined_call_operand.vmem [shape: bf16[16,32], index: 4, kind: input, shape index: {}]
  %s5 = inlined_call_operand.vmem [shape: f32[1,32], index: 5, kind: input, shape index: {}]
  %s6 = inlined_call_operand.hbm [shape: f32[2,32,32], index: 6, kind: output, shape index: {0}]
  %s7 = inlined_call_operand.hbm [shape: f32[2,32,32], index: 7, kind: output, shape index: {1}]
  %8 = xla_tuple %s6, %s7
  %s9 = sld [smem:[#allocation0]]
  $region77: #{tpu_custom_call.1} parent=0
    _
  %s11 = ssub.s32 1, %s9
  %s12 = scalar_select 0, %s11, %s9
  $region1: #{tpu_custom_call.1} parent=0
    #allocation2 [shape = 'u8[8192]{0}', space=vmem, size = 0x2000, scoped, tag = 'input window, operand 0']
    #allocation3 [shape = 's32[2]{0}', space=sflag, size = 0x8, scoped, tag = 'scoped memory for tpu_custom_call.1']
    #allocation4 [shape = 's32[2]{0}', space=sflag, size = 0x8, scoped, tag = 'scoped memory for tpu_custom_call.1']
    #allocation5 [shape = 'u8[8192]{0}', space=vmem, size = 0x2000, scoped, tag = 'input window, operand 1']
    #allocation6 [shape = 's32[2]{0}', space=sflag, size = 0x8, scoped, tag = 'scoped memory for tpu_custom_call.1']
    #allocation7 [shape = 'u8[4096]{0}', space=vmem, size = 0x1000, scoped, tag = 'input window, operand 2, single buffered']
    #allocation8 [shape = 'u8[32768]{0}', space=vmem, size = 0x8000, scoped, tag = 'output window, operand 0']
    #allocation9 [shape = 'u8[32768]{0}', space=vmem, size = 0x8000, scoped, tag = 'output window, operand 1']
    #allocation10 [shape = 's32[2]{0}', space=sflag, size = 0x8, scoped, tag = 'scoped memory for tpu_custom_call.1']
    %13 = vsyncpa [#allocation3], 0
    %s14 = scalar_lea.sflag [#allocation3], 1
    %15 = vsyncpa %s14, 0
    %16 = vsyncpa [#allocation6], 0
    %s17 = scalar_lea.sflag [#allocation6], 1
    %18 = vsyncpa %s17, 0
    %19 = vsyncpa [#allocation4], 0
    %s20 = scalar_lea.sflag [#allocation4], 1
    %21 = vsyncpa %s20, 0
    %22 = vsyncpa [#allocation10], 0
    %s23 = scalar_lea.sflag [#allocation10], 1
    %24 = vsyncpa %s23, 0
    loop: start=0, step=1, limit=4
    $region2: #{tpu_custom_call.1} parent=1 // loop_pre_header
      _
    $region3: #{tpu_custom_call.1} parent=1 // loop_header
      %s26 = sphi 0, %s30
      %p27 = scmp.ge.s32.totalorder %s26, 4
      %s33 = sphi 0, %s45
      %s34 = sphi 0, %s41
      %s35 = sphi 0, %s33
      %s36 = sphi 0, %s34
      %s37 = sphi 0, %s35
      %s38 = sphi 0, %s36
      %s50 = sphi 0, %s52
      %s53 = sphi 0, %s50
      %s54 = sphi 0, %s53
      %s70 = sphi 0, %s54
      %s78 = sphi 0, %s80
      %s81 = sphi 0, %s78
      %s82 = sphi 0, %s81
      %s98 = sphi 0, %s82
      %s102 = sphi 0, %s102
      %s104 = sphi 0, %s102
      %s105 = sphi 0, %s104
      %s119 = sphi 0, %s105
      %s123 = sphi 0, %s123
      %s125 = sphi 0, %s123
      %s126 = sphi 0, %s125
      %s140 = sphi 0, %s126
      %s144 = sphi 0, %s144
      %s146 = sphi 0, %s144
      %s147 = sphi 0, %s146
      %s161 = sphi 0, %s147
      %s165 = sphi 0, %s165
      %s167 = sphi 0, %s165
      %s168 = sphi 0, %s167
      %s182 = sphi 0, %s168
      %s190 = sphi 0, %s192
      %s193 = sphi 0, %s190
      %s194 = sphi 0, %s193
      %s210 = sphi 0, %s194
      %s218 = sphi 0, %s220
      %s221 = sphi 0, %s218
      %s222 = sphi 0, %s221
      %s238 = sphi 0, %s222
    $region4: #{tpu_custom_call.1} parent=1 // loop_header_branch
      %29 = sbr.rel (%p27) target = $region8
    $region5: #{tpu_custom_call.1} parent=1 // loop_body
      %s31 = ssub.s32 %s26, 1
      %s32 = ssub.s32 %s26, 2
      %s39 = sadd.s32 1, %s34
      %p40 = scmp.ge.s32.totalorder %s39, 1
      %s41 = scalar_select %p40, 0, %s39
      %s42 = sadd.s32 1, %s33
      %s43 = scalar_select %p40, %s42, %s33
      %p44 = scmp.ge.s32.totalorder %s43, 2
      %s45 = scalar_select %p44, 0, %s43
      %s46 = ssub.s32 %s33, %s45
      %s47 = ssub.s32 %s34, %s41
      %s48 = sor.u32 %s46, %s47
      %p49 = scmp.eq.s32.totalorder %s48, 0
      %s51 = sadd.s32 %s50, 1
      %s52 = scalar_select %p49, %s50, %s51
      %p55 = pneg %p49
      %p56 = scmp.eq.s32.totalorder %s26, 1
      %p57 = por %p55, %p56
      %p58 = scmp.ne.s32.totalorder %s50, %s53
      %p59 = scmp.eq.s32.totalorder %s26, 0
      %p60 = por %p58, %p59
      %p61 = scmp.ne.s32.totalorder %s50, %s53
      %p62 = scmp.eq.s32.totalorder %s31, 1
      %p63 = por %p61, %p62
      %p64 = scmp.ne.s32.totalorder %s53, %s54
      %p65 = scmp.eq.s32.totalorder %s31, 0
      %p66 = por %p64, %p65
      %p67 = scmp.ne.s32.totalorder %s53, %s54
      %p68 = scmp.eq.s32.totalorder %s32, 1
      %p69 = por %p67, %p68
      %p71 = scmp.ne.s32.totalorder %s54, %s70
      %p72 = scmp.eq.s32.totalorder %s32, 0
      %p73 = por %p71, %p72
      %s74 = ssub.s32 %s33, %s45
      %s75 = ssub.s32 %s34, %s41
      %s76 = sor.u32 %s74, %s75
      %p77 = scmp.eq.s32.totalorder %s76, 0
      %s79 = sadd.s32 %s78, 1
      %s80 = scalar_select %p77, %s78, %s79
      %p83 = pneg %p77
      %p84 = scmp.eq.s32.totalorder %s26, 1
      %p85 = por %p83, %p84
      %p86 = scmp.ne.s32.totalorder %s78, %s81
      %p87 = scmp.eq.s32.totalorder %s26, 0
      %p88 = por %p86, %p87
      %p89 = scmp.ne.s32.totalorder %s78, %s81
      %p90 = scmp.eq.s32.totalorder %s31, 1
      %p91 = por %p89, %p90
      %p92 = scmp.ne.s32.totalorder %s81, %s82
      %p93 = scmp.eq.s32.totalorder %s31, 0
      %p94 = por %p92, %p93
      %p95 = scmp.ne.s32.totalorder %s81, %s82
      %p96 = scmp.eq.s32.totalorder %s32, 1
      %p97 = por %p95, %p96
      %p99 = scmp.ne.s32.totalorder %s82, %s98
      %p100 = scmp.eq.s32.totalorder %s32, 0
      %p101 = por %p99, %p100
      %s103 = sadd.s32 %s102, 1
      %p106 = scmp.eq.s32.totalorder %s26, 1
      %p107 = scmp.ne.s32.totalorder %s102, %s104
      %p108 = scmp.eq.s32.totalorder %s26, 0
      %p109 = por %p107, %p108
      %p110 = scmp.ne.s32.totalorder %s102, %s104
      %p111 = scmp.eq.s32.totalorder %s31, 1
      %p112 = por %p110, %p111
      %p113 = scmp.ne.s32.totalorder %s104, %s105
      %p114 = scmp.eq.s32.totalorder %s31, 0
      %p115 = por %p113, %p114
      %p116 = scmp.ne.s32.totalorder %s104, %s105
      %p117 = scmp.eq.s32.totalorder %s32, 1
      %p118 = por %p116, %p117
      %p120 = scmp.ne.s32.totalorder %s105, %s119
      %p121 = scmp.eq.s32.totalorder %s32, 0
      %p122 = por %p120, %p121
      %s124 = sadd.s32 %s123, 1
      %p127 = scmp.eq.s32.totalorder %s26, 1
      %p128 = scmp.ne.s32.totalorder %s123, %s125
      %p129 = scmp.eq.s32.totalorder %s26, 0
      %p130 = por %p128, %p129
      %p131 = scmp.ne.s32.totalorder %s123, %s125
      %p132 = scmp.eq.s32.totalorder %s31, 1
      %p133 = por %p131, %p132
      %p134 = scmp.ne.s32.totalorder %s125, %s126
      %p135 = scmp.eq.s32.totalorder %s31, 0
      %p136 = por %p134, %p135
      %p137 = scmp.ne.s32.totalorder %s125, %s126
      %p138 = scmp.eq.s32.totalorder %s32, 1
      %p139 = por %p137, %p138
      %p141 = scmp.ne.s32.totalorder %s126, %s140
      %p142 = scmp.eq.s32.totalorder %s32, 0
      %p143 = por %p141, %p142
      %s145 = sadd.s32 %s144, 1
      %p148 = scmp.eq.s32.totalorder %s26, 1
      %p149 = scmp.ne.s32.totalorder %s144, %s146
      %p150 = scmp.eq.s32.totalorder %s26, 0
      %p151 = por %p149, %p150
      %p152 = scmp.ne.s32.totalorder %s144, %s146
      %p153 = scmp.eq.s32.totalorder %s31, 1
      %p154 = por %p152, %p153
      %p155 = scmp.ne.s32.totalorder %s146, %s147
      %p156 = scmp.eq.s32.totalorder %s31, 0
      %p157 = por %p155, %p156
      %p158 = scmp.ne.s32.totalorder %s146, %s147
      %p159 = scmp.eq.s32.totalorder %s32, 1
      %p160 = por %p158, %p159
      %p162 = scmp.ne.s32.totalorder %s147, %s161
      %p163 = scmp.eq.s32.totalorder %s32, 0
      %p164 = por %p162, %p163
      %s166 = sadd.s32 %s165, 1
      %p169 = scmp.eq.s32.totalorder %s26, 1
      %p170 = scmp.ne.s32.totalorder %s165, %s167
      %p171 = scmp.eq.s32.totalorder %s26, 0
      %p172 = por %p170, %p171
      %p173 = scmp.ne.s32.totalorder %s165, %s167
      %p174 = scmp.eq.s32.totalorder %s31, 1
      %p175 = por %p173, %p174
      %p176 = scmp.ne.s32.totalorder %s167, %s168
      %p177 = scmp.eq.s32.totalorder %s31, 0
      %p178 = por %p176, %p177
      %p179 = scmp.ne.s32.totalorder %s167, %s168
      %p180 = scmp.eq.s32.totalorder %s32, 1
      %p181 = por %p179, %p180
      %p183 = scmp.ne.s32.totalorder %s168, %s182
      %p184 = scmp.eq.s32.totalorder %s32, 0
      %p185 = por %p183, %p184
      %s186 = ssub.s32 %s33, %s45
      %s187 = ssub.s32 %s34, %s41
      %s188 = sor.u32 %s186, %s187
      %p189 = scmp.eq.s32.totalorder %s188, 0
      %s191 = sadd.s32 %s190, 1
      %s192 = scalar_select %p189, %s190, %s191
      %p195 = pneg %p189
      %p196 = scmp.eq.s32.totalorder %s26, 1
      %p197 = por %p195, %p196
      %p198 = scmp.ne.s32.totalorder %s190, %s193
      %p199 = scmp.eq.s32.totalorder %s26, 0
      %p200 = por %p198, %p199
      %p201 = scmp.ne.s32.totalorder %s190, %s193
      %p202 = scmp.eq.s32.totalorder %s31, 1
      %p203 = por %p201, %p202
      %p204 = scmp.ne.s32.totalorder %s193, %s194
      %p205 = scmp.eq.s32.totalorder %s31, 0
      %p206 = por %p204, %p205
      %p207 = scmp.ne.s32.totalorder %s193, %s194
      %p208 = scmp.eq.s32.totalorder %s32, 1
      %p209 = por %p207, %p208
      %p211 = scmp.ne.s32.totalorder %s194, %s210
      %p212 = scmp.eq.s32.totalorder %s32, 0
      %p213 = por %p211, %p212
      %s214 = ssub.s32 %s33, %s45
      %s215 = ssub.s32 %s34, %s41
      %s216 = sor.u32 %s214, %s215
      %p217 = scmp.eq.s32.totalorder %s216, 0
      %s219 = sadd.s32 %s218, 1
      %s220 = scalar_select %p217, %s218, %s219
      %p223 = pneg %p217
      %p224 = scmp.eq.s32.totalorder %s26, 1
      %p225 = por %p223, %p224
      %p226 = scmp.ne.s32.totalorder %s218, %s221
      %p227 = scmp.eq.s32.totalorder %s26, 0
      %p228 = por %p226, %p227
      %p229 = scmp.ne.s32.totalorder %s218, %s221
      %p230 = scmp.eq.s32.totalorder %s31, 1
      %p231 = por %p229, %p230
      %p232 = scmp.ne.s32.totalorder %s221, %s222
      %p233 = scmp.eq.s32.totalorder %s31, 0
      %p234 = por %p232, %p233
      %p235 = scmp.ne.s32.totalorder %s221, %s222
      %p236 = scmp.eq.s32.totalorder %s32, 1
      %p237 = por %p235, %p236
      %p239 = scmp.ne.s32.totalorder %s222, %s238
      %p240 = scmp.eq.s32.totalorder %s32, 0
      %p241 = por %p239, %p240
      %p242 = scmp.le.s32.totalorder 1, %s26
      %p243 = scmp.lt.s32.totalorder %s26, 3
      %p244 = pnand %p242, %p243
      %p245 = pneg %p244
      // Predicated region
      $region9: #{tpu_custom_call.1} parent=5 // pred_check
        _
      $region10: #{tpu_custom_call.1} parent=5 // pred_check_branch
        %247 = sbr.rel (%p244) target = $region12
      $region11: #{tpu_custom_call.1} parent=5 // pred_region
        %s248 = ssub.s32 %s26, 1
        // Predicated region
        $region13: #{tpu_custom_call.1} parent=11 // pred_check
          %p249 = pneg %p115
        $region14: #{tpu_custom_call.1} parent=11 // pred_check_branch
          %251 = sbr.rel (%p249) target = $region16
        $region15: #{tpu_custom_call.1} parent=11 // pred_region
          %s253 = ssub.s32 128, 128
          %254 = vsyncadd [#allocation6], %s253
          %s255 = sshll.u32 [#allocation7], 4
          %s256 = int_to_ptr.vmem [resolvable:$true] %s255
          %261 = dma.hbm_to_vmem [thread:$0]  %s2, 128, %s256, [#allocation6], 64, 64, 4
        $region16: #{tpu_custom_call.1} parent=11 // pred_fallthru
          _
        // Predicated region
        $region17: #{tpu_custom_call.1} parent=11 // pred_check
          %p262 = pneg %p136
        $region18: #{tpu_custom_call.1} parent=11 // pred_check_branch
          %264 = sbr.rel (%p262) target = $region20
        $region19: #{tpu_custom_call.1} parent=11 // pred_region
          _
        $region20: #{tpu_custom_call.1} parent=11 // pred_fallthru
          _
        // Predicated region
        $region21: #{tpu_custom_call.1} parent=11 // pred_check
          %p265 = pneg %p157
        $region22: #{tpu_custom_call.1} parent=11 // pred_check_branch
          %267 = sbr.rel (%p265) target = $region24
        $region23: #{tpu_custom_call.1} parent=11 // pred_region
          _
        $region24: #{tpu_custom_call.1} parent=11 // pred_fallthru
          _
        // Predicated region
        $region25: #{tpu_custom_call.1} parent=11 // pred_check
          %p268 = pneg %p178
        $region26: #{tpu_custom_call.1} parent=11 // pred_check_branch
          %270 = sbr.rel (%p268) target = $region28
        $region27: #{tpu_custom_call.1} parent=11 // pred_region
          _
        $region28: #{tpu_custom_call.1} parent=11 // pred_fallthru
          _
      $region12: #{tpu_custom_call.1} parent=5 // pred_fallthru
        _
      %p271 = scmp.lt.s32.totalorder %s26, 2
      // Predicated region
      $region29: #{tpu_custom_call.1} parent=5 // pred_check
        %p272 = pneg %p271
      $region30: #{tpu_custom_call.1} parent=5 // pred_check_branch
        %274 = sbr.rel (%p272) target = $region32
      $region31: #{tpu_custom_call.1} parent=5 // pred_region
        // Predicated region
        $region33: #{tpu_custom_call.1} parent=31 // pred_check
          %p275 = pneg %p60
        $region34: #{tpu_custom_call.1} parent=31 // pred_check_branch
          %277 = sbr.rel (%p275) target = $region36
        $region35: #{tpu_custom_call.1} parent=31 // pred_region
          %s278 = sand.u32 %s50, 1
          %s279 = scalar_lea.sflag [#allocation3], %s278
          %s280 = sand.u32 %s50, 1
          %s281 = smul.addr %s280, 8
          %s282 = scalar_lea.vmem [#allocation2], %s281
          %s284 = ssub.s32 128, 128
          %285 = vsyncadd %s279, %s284
          %s286 = sadd.s32 %s34, %s33
          %s287 = smul.addr %s286, 128
          %s288 = scalar_lea.hbm %s0, %s287
          %s290 = sshll.u32 %s282, 4
          %s291 = int_to_ptr.vmem [resolvable:$true] %s290
          %293 = dma.hbm_to_vmem [thread:$0]  %s288, 128, %s291, %s279
        $region36: #{tpu_custom_call.1} parent=31 // pred_fallthru
          _
        // Predicated region
        $region37: #{tpu_custom_call.1} parent=31 // pred_check
          %p294 = pneg %p88
        $region38: #{tpu_custom_call.1} parent=31 // pred_check_branch
          %296 = sbr.rel (%p294) target = $region40
        $region39: #{tpu_custom_call.1} parent=31 // pred_region
          %s297 = sand.u32 %s26, 1
          %s298 = scalar_lea.sflag [#allocation6], %s297
          %s299 = sand.u32 %s78, 1
          %s300 = smul.addr %s299, 8
          %s301 = scalar_lea.vmem [#allocation5], %s300
          %s303 = ssub.s32 128, 128
          %304 = vsyncadd %s298, %s303
          %s305 = sadd.s32 %s34, %s33
          %s306 = smul.addr %s305, 128
          %s307 = scalar_lea.hbm %s1, %s306
          %s309 = sshll.u32 %s301, 4
          %s310 = int_to_ptr.vmem [resolvable:$true] %s309
          %312 = dma.hbm_to_vmem [thread:$0]  %s307, 128, %s310, %s298
        $region40: #{tpu_custom_call.1} parent=31 // pred_fallthru
          _
      $region32: #{tpu_custom_call.1} parent=5 // pred_fallthru
        _
      %p313 = scmp.le.s32.totalorder 1, %s26
      %p314 = scmp.lt.s32.totalorder %s26, 3
      %p315 = pnand %p313, %p314
      %p316 = pneg %p315
      // Predicated region
      $region41: #{tpu_custom_call.1} parent=5 // pred_check
        _
      $region42: #{tpu_custom_call.1} parent=5 // pred_check_branch
        %318 = sbr.rel (%p315) target = $region44
      $region43: #{tpu_custom_call.1} parent=5 // pred_region
        %s319 = ssub.s32 %s26, 1
        %s320 = sand.u32 %s53, 1
        %s321 = scalar_lea.sflag [#allocation3], %s320
        %s322 = sand.u32 %s53, 1
        %s323 = smul.addr %s322, 8
        %s324 = scalar_lea.vmem [#allocation2], %s323
        // Predicated region
        $region45: #{tpu_custom_call.1} parent=43 // pred_check
          %p325 = pneg %p66
        $region46: #{tpu_custom_call.1} parent=43 // pred_check_branch
          %327 = sbr.rel (%p325) target = $region48
        $region47: #{tpu_custom_call.1} parent=43 // pred_region
          %328 = dma.done %s321, 128
        $region48: #{tpu_custom_call.1} parent=43 // pred_fallthru
          _
        %s329 = sand.u32 %s31, 1
        %s330 = scalar_lea.sflag [#allocation6], %s329
        %s331 = sand.u32 %s81, 1
        %s332 = smul.addr %s331, 8
        %s333 = scalar_lea.vmem [#allocation5], %s332
        // Predicated region
        $region49: #{tpu_custom_call.1} parent=43 // pred_check
          %p334 = pneg %p94
        $region50: #{tpu_custom_call.1} parent=43 // pred_check_branch
          %336 = sbr.rel (%p334) target = $region52
        $region51: #{tpu_custom_call.1} parent=43 // pred_region
          %337 = dma.done %s330, 128
        $region52: #{tpu_custom_call.1} parent=43 // pred_fallthru
          _
        // Predicated region
        $region53: #{tpu_custom_call.1} parent=43 // pred_check
          %p338 = pneg %p115
        $region54: #{tpu_custom_call.1} parent=43 // pred_check_branch
          %340 = sbr.rel (%p338) target = $region56
        $region55: #{tpu_custom_call.1} parent=43 // pred_region
          %341 = dma.done [#allocation6], 128
        $region56: #{tpu_custom_call.1} parent=43 // pred_fallthru
          _
        %s342 = sand.u32 %s53, 1
        %s343 = scalar_lea.sflag [#allocation3], %s342
        %s344 = sand.u32 %s53, 1
        %s345 = smul.addr %s344, 8
        %s346 = scalar_lea.vmem [#allocation2], %s345
        %p347 = pneg %p66
        %p348 = pneg %p63
        %s349 = sand.u32 %s31, 1
        %s350 = scalar_lea.sflag [#allocation6], %s349
        %s351 = sand.u32 %s81, 1
        %s352 = smul.addr %s351, 8
        %s353 = scalar_lea.vmem [#allocation5], %s352
        %p354 = pneg %p94
        %p355 = pneg %p91
        %p356 = pneg %p115
        %p357 = pneg %p112
        %p358 = pneg %p136
        %p359 = pneg %p133
        %p360 = pneg %p157
        %p361 = pneg %p154
        %p362 = pneg %p178
        %p363 = pneg %p175
        %p364 = pneg %p206
        %p365 = pneg %p203
        %s366 = sand.u32 %s193, 1
        %s367 = scalar_lea.sflag [#allocation4], %s366
        %s368 = sand.u32 %s193, 1
        %s369 = smul.addr %s368, 32
        %s370 = scalar_lea.vmem [#allocation8], %s369
        %p371 = pneg %p234
        %p372 = pneg %p231
        %s373 = sand.u32 %s221, 1
        %s374 = scalar_lea.sflag [#allocation10], %s373
        %s375 = sand.u32 %s221, 1
        %s376 = smul.addr %s375, 32
        %s377 = scalar_lea.vmem [#allocation9], %s376
        %s378 = smul.u32 4, %s36
        %s379 = smul.u32 4, %s36
        %v381 = vld [vmem:[%s324] sm:$0xff]
        %v382 = vld [vmem:[%s333] sm:$0xff]
        %v383 = vlaneseq
        %v384 = vshrl.u32 %v383, 7
        %v385 = vcombine.high %v382, %v382
        %v387 = vunpack.c.l.s4 1966171168
        %v388 = vunpack.c.0.s8 %v387
        %v389 = vlaneseq
        %v390 = vshrl.u32 %v389, 7
        %v391 = vsub.s32 %v388, %v390
        %v392 = vrot.slane %v382, %v391
        %v394 = vunpack.c.l.s4 1966171168
        %v395 = vunpack.c.0.s8 %v394
        %v396 = vlaneseq
        %v397 = vshrl.u32 %v396, 7
        %v398 = vsub.s32 %v395, %v397
        %v399 = vrot.slane %v385, %v398
        %v400 = vcombine.high %v392, %v392
        %v401 = vcombine.high %v399, %v399
        %v403 = vunpack.c.l.s4 1966171168
        %v404 = vunpack.c.0.s8 %v403
        %v405 = vlaneseq
        %v406 = vshrl.u32 %v405, 7
        %v407 = vsub.s32 %v404, %v406
        %v408 = vrot.slane %v392, %v407
        %v410 = vunpack.c.l.s4 1966171168
        %v411 = vunpack.c.0.s8 %v410
        %v412 = vlaneseq
        %v413 = vshrl.u32 %v412, 7
        %v414 = vsub.s32 %v411, %v413
        %v415 = vrot.slane %v399, %v414
        %v417 = vunpack.c.l.s4 1966171168
        %v418 = vunpack.c.0.s8 %v417
        %v419 = vlaneseq
        %v420 = vshrl.u32 %v419, 7
        %v421 = vsub.s32 %v418, %v420
        %v422 = vrot.slane %v400, %v421
        %v424 = vunpack.c.l.s4 1966171168
        %v425 = vunpack.c.0.s8 %v424
        %v426 = vlaneseq
        %v427 = vshrl.u32 %v426, 7
        %v428 = vsub.s32 %v425, %v427
        %v429 = vrot.slane %v401, %v428
        %v430 = vcombine.high %v408, %v408
        %v431 = vcombine.high %v415, %v415
        %v432 = vcombine.high %v422, %v422
        %v433 = vcombine.high %v429, %v429
        %v434 = vlaneseq
        %v435 = vshrl.u32 %v434, 7
        %v436 = vsub.s32 0, %v435
        %v437 = vrot.slane %v408, %v436
        %v438 = vlaneseq
        %v439 = vshrl.u32 %v438, 7
        %v440 = vsub.s32 0, %v439
        %v441 = vrot.slane %v422, %v440
        %v442 = vlaneseq
        %v443 = vshrl.u32 %v442, 7
        %v444 = vsub.s32 0, %v443
        %v445 = vrot.slane %v430, %v444
        %v446 = vlaneseq
        %v447 = vshrl.u32 %v446, 7
        %v448 = vsub.s32 0, %v447
        %v449 = vrot.slane %v432, %v448
        %v450 = vlaneseq
        %v451 = vshrl.u32 %v450, 7
        %v452 = vsub.s32 0, %v451
        %v453 = vrot.slane %v415, %v452
        %v454 = vlaneseq
        %v455 = vshrl.u32 %v454, 7
        %v456 = vsub.s32 0, %v455
        %v457 = vrot.slane %v429, %v456
        %v458 = vlaneseq
        %v459 = vshrl.u32 %v458, 7
        %v460 = vsub.s32 0, %v459
        %v461 = vrot.slane %v431, %v460
        %v462 = vlaneseq
        %v463 = vshrl.u32 %v462, 7
        %v464 = vsub.s32 0, %v463
        %v465 = vrot.slane %v433, %v464
        %vm466 = vcmp.eq.s32.totalorder %v437, %v384
        %vm467 = vcmp.eq.s32.totalorder %v441, %v384
        %vm468 = vcmp.eq.s32.totalorder %v445, %v384
        %vm469 = vcmp.eq.s32.totalorder %v449, %v384
        %vm470 = vcmp.eq.s32.totalorder %v453, %v384
        %vm471 = vcmp.eq.s32.totalorder %v457, %v384
        %vm472 = vcmp.eq.s32.totalorder %v461, %v384
        %vm473 = vcmp.eq.s32.totalorder %v465, %v384
        %v475 = vcombine.high %v381, %v381
        %v477 = vunpack.c.l.s4 1966171168
        %v478 = vunpack.c.0.s8 %v477
        %v479 = vlaneseq
        %v480 = vshrl.u32 %v479, 7
        %v481 = vsub.s32 %v478, %v480
        %v482 = vrot.slane %v381, %v481
        %v484 = vunpack.c.l.s4 1966171168
        %v485 = vunpack.c.0.s8 %v484
        %v486 = vlaneseq
        %v487 = vshrl.u32 %v486, 7
        %v488 = vsub.s32 %v485, %v487
        %v489 = vrot.slane %v475, %v488
        %v490 = vcombine.high %v482, %v482
        %v491 = vcombine.high %v489, %v489
        %v493 = vunpack.c.l.s4 1966171168
        %v494 = vunpack.c.0.s8 %v493
        %v495 = vlaneseq
        %v496 = vshrl.u32 %v495, 7
        %v497 = vsub.s32 %v494, %v496
        %v498 = vrot.slane %v482, %v497
        %v500 = vunpack.c.l.s4 1966171168
        %v501 = vunpack.c.0.s8 %v500
        %v502 = vlaneseq
        %v503 = vshrl.u32 %v502, 7
        %v504 = vsub.s32 %v501, %v503
        %v505 = vrot.slane %v489, %v504
        %v507 = vunpack.c.l.s4 1966171168
        %v508 = vunpack.c.0.s8 %v507
        %v509 = vlaneseq
        %v510 = vshrl.u32 %v509, 7
        %v511 = vsub.s32 %v508, %v510
        %v512 = vrot.slane %v490, %v511
        %v514 = vunpack.c.l.s4 1966171168
        %v515 = vunpack.c.0.s8 %v514
        %v516 = vlaneseq
        %v517 = vshrl.u32 %v516, 7
        %v518 = vsub.s32 %v515, %v517
        %v519 = vrot.slane %v491, %v518
        %v520 = vcombine.high %v498, %v498
        %v521 = vcombine.high %v505, %v505
        %v522 = vcombine.high %v512, %v512
        %v523 = vcombine.high %v519, %v519
        %v524 = vlaneseq
        %v525 = vshrl.u32 %v524, 7
        %v526 = vsub.s32 0, %v525
        %v527 = vrot.slane %v498, %v526
        %v528 = vlaneseq
        %v529 = vshrl.u32 %v528, 7
        %v530 = vsub.s32 0, %v529
        %v531 = vrot.slane %v512, %v530
        %v532 = vlaneseq
        %v533 = vshrl.u32 %v532, 7
        %v534 = vsub.s32 0, %v533
        %v535 = vrot.slane %v520, %v534
        %v536 = vlaneseq
        %v537 = vshrl.u32 %v536, 7
        %v538 = vsub.s32 0, %v537
        %v539 = vrot.slane %v522, %v538
        %v540 = vlaneseq
        %v541 = vshrl.u32 %v540, 7
        %v542 = vsub.s32 0, %v541
        %v543 = vrot.slane %v505, %v542
        %v544 = vlaneseq
        %v545 = vshrl.u32 %v544, 7
        %v546 = vsub.s32 0, %v545
        %v547 = vrot.slane %v519, %v546
        %v548 = vlaneseq
        %v549 = vshrl.u32 %v548, 7
        %v550 = vsub.s32 0, %v549
        %v551 = vrot.slane %v521, %v550
        %v552 = vlaneseq
        %v553 = vshrl.u32 %v552, 7
        %v554 = vsub.s32 0, %v553
        %v555 = vrot.slane %v523, %v554
        %v564 = vsel %vm466, %v527, 0.0
        %v565 = vsel %vm467, %v531, 0.0
        %v566 = vsel %vm468, %v535, 0.0
        %v567 = vsel %vm469, %v539, 0.0
        %v568 = vsel %vm470, %v543, 0.0
        %v569 = vsel %vm471, %v547, 0.0
        %v570 = vsel %vm472, %v551, 0.0
        %v571 = vsel %vm473, %v555, 0.0
        %v572 = vpack.c.bf16 %v564, %v564
        %v573 = vpack.c.bf16 %v565, %v565
        %v574 = vpack.c.bf16 %v566, %v566
        %v575 = vpack.c.bf16 %v567, %v567
        %v576 = vpack.c.bf16 %v568, %v568
        %v577 = vpack.c.bf16 %v569, %v569
        %v578 = vpack.c.bf16 %v570, %v570
        %v579 = vpack.c.bf16 %v571, %v571
        %v580 = vld [vmem:[#allocation7] sm:$0xf]
        %v581 = vld [vmem:[#allocation7 + $0x4] sm:$0xf]
        %v582 = vld [vmem:[%s3] sm:$0x1]
        %v584 = vlaneseq
        %v585 = vshrl.u32 %v584, 7
        %v586 = vsub.s32 0, %v585
        %v587 = vrot.slane %v582, %v586
        %v597 = vcombine.low %v572, %v573
        %v598 = vcombine.low %v574, %v575
        %v600 = vunpack.c.l.s4 1983009808
        %v601 = vunpack.c.0.s8 %v600
        %v602 = vlaneseq
        %v603 = vshrl.u32 %v602, 7
        %v604 = vsub.s32 %v601, %v603
        %v605 = vrot.slane %v597, %v604
        %v607 = vunpack.c.l.s4 1983009808
        %v608 = vunpack.c.0.s8 %v607
        %v609 = vlaneseq
        %v610 = vshrl.u32 %v609, 7
        %v611 = vsub.s32 %v608, %v610
        %v612 = vrot.slane %v598, %v611
        %v613 = vcombine.low %v605, %v612
        %v614 = vcombine.low %v576, %v577
        %v615 = vcombine.low %v578, %v579
        %v617 = vunpack.c.l.s4 1983009808
        %v618 = vunpack.c.0.s8 %v617
        %v619 = vlaneseq
        %v620 = vshrl.u32 %v619, 7
        %v621 = vsub.s32 %v618, %v620
        %v622 = vrot.slane %v614, %v621
        %v624 = vunpack.c.l.s4 1983009808
        %v625 = vunpack.c.0.s8 %v624
        %v626 = vlaneseq
        %v627 = vshrl.u32 %v626, 7
        %v628 = vsub.s32 %v625, %v627
        %v629 = vrot.slane %v615, %v628
        %v630 = vcombine.low %v622, %v629
        %v633 = vunpack.c.l.b16 %v580
        %v634 = vunpack.c.l.b16 %v581
        %v635 = vpack.c.b16 %v634, %v633
        %vm637 = vcmask 130048
        %v639 = vsel %vm637, %v613, 0
        %v642 = vsel %vm637, %v630, 0
        %644 = vmatprep.subr.bf16.mxu0 0
        %645 = vmatpush1.bf16.msra.mxu0 %v635
        %646 = vmatprep.subr.bf16.mxu0 0
        %647 = vmatpush1.bf16.msra.mxu0 0
        %648 = vmatprep.subr.bf16.mxu0 0
        %649 = vmatpush1.bf16.msra.mxu0 0
        %650 = vmatprep.subr.bf16.mxu0 0
        %651 = vmatpush1.bf16.msra.mxu0 0
        %652 = vmatprep.subr.bf16.mxu0 0
        %653 = vmatpush1.bf16.msra.mxu0 0
        %654 = vmatprep.subr.bf16.mxu0 0
        %655 = vmatpush1.bf16.msra.mxu0 0
        %656 = vmatprep.subr.bf16.mxu0 0
        %657 = vmatpush1.bf16.msra.mxu0 0
        %658 = vmatprep.subr.bf16.mxu0 0
        %659 = vmatpush1.bf16.msra.mxu0 0
        %660 = vmatprep.subr.bf16.mxu0 0
        %661 = vmatpush1.bf16.msra.mxu0 0
        %662 = vmatprep.subr.bf16.mxu0 0
        %663 = vmatpush1.bf16.msra.mxu0 0
        %664 = vmatprep.subr.bf16.mxu0 0
        %665 = vmatpush1.bf16.msra.mxu0 0
        %666 = vmatprep.subr.bf16.mxu0 0
        %667 = vmatpush1.bf16.msra.mxu0 0
        %668 = vmatprep.subr.bf16.mxu0 0
        %669 = vmatpush1.bf16.msra.mxu0 0
        %670 = vmatprep.subr.bf16.mxu0 0
        %671 = vmatpush1.bf16.msra.mxu0 0
        %672 = vmatprep.subr.bf16.mxu0 0
        %673 = vmatpush1.bf16.msra.mxu0 0
        %674 = vmatprep.subr.bf16.mxu0 0
        %675 = vmatpush1.bf16.msra.mxu0 0
        %676 = vmatprep.mubr.bf16.mxu0 0
        %677 = vmatmul.mubr.bf16.gmra.mrb[0].mxu0 %v639
        %v678 = vpop.f32.mrb[0].mxu0
        %v679 = vadd.f32 %v587, %v678
        %v680 = vpop.f32.mrb[0].mxu0
        %v681 = vpop.f32.mrb[0].mxu0
        %v682 = vadd.f32 %v587, %v681
        %v683 = vpop.f32.mrb[0].mxu0
        %684 = vmatprep.mubr.bf16.mxu0 0
        %685 = vmatmul.mubr.bf16.gmra.mrb[0].mxu0 %v642
        %v686 = vpop.f32.mrb[0].mxu0
        %v687 = vadd.f32 %v587, %v686
        %v688 = vpop.f32.mrb[0].mxu0
        %v689 = vpop.f32.mrb[0].mxu0
        %v690 = vadd.f32 %v587, %v689
        %v691 = vpop.f32.mrb[0].mxu0
        %692 = vdwg.mxu0
        %v693 = vld [vmem:[%s4] sm:$0xf]
        %v694 = vld [vmem:[%s4 + $0x4] sm:$0xf]
        %v695 = vld [vmem:[%s5] sm:$0x1]
        %v697 = vlaneseq
        %v698 = vshrl.u32 %v697, 7
        %v699 = vsub.s32 0, %v698
        %v700 = vrot.slane %v695, %v699
        %v704 = vunpack.c.l.b16 %v693
        %v705 = vunpack.c.l.b16 %v694
        %v706 = vpack.c.b16 %v705, %v704
        %708 = vmatprep.subr.bf16.mxu0 0
        %709 = vmatpush1.bf16.msra.mxu0 %v706
        %710 = vmatprep.subr.bf16.mxu0 0
        %711 = vmatpush1.bf16.msra.mxu0 0
        %712 = vmatprep.subr.bf16.mxu0 0
        %713 = vmatpush1.bf16.msra.mxu0 0
        %714 = vmatprep.subr.bf16.mxu0 0
        %715 = vmatpush1.bf16.msra.mxu0 0
        %716 = vmatprep.subr.bf16.mxu0 0
        %717 = vmatpush1.bf16.msra.mxu0 0
        %718 = vmatprep.subr.bf16.mxu0 0
        %719 = vmatpush1.bf16.msra.mxu0 0
        %720 = vmatprep.subr.bf16.mxu0 0
        %721 = vmatpush1.bf16.msra.mxu0 0
        %722 = vmatprep.subr.bf16.mxu0 0
        %723 = vmatpush1.bf16.msra.mxu0 0
        %724 = vmatprep.subr.bf16.mxu0 0
        %725 = vmatpush1.bf16.msra.mxu0 0
        %726 = vmatprep.subr.bf16.mxu0 0
        %727 = vmatpush1.bf16.msra.mxu0 0
        %728 = vmatprep.subr.bf16.mxu0 0
        %729 = vmatpush1.bf16.msra.mxu0 0
        %730 = vmatprep.subr.bf16.mxu0 0
        %731 = vmatpush1.bf16.msra.mxu0 0
        %732 = vmatprep.subr.bf16.mxu0 0
        %733 = vmatpush1.bf16.msra.mxu0 0
        %734 = vmatprep.subr.bf16.mxu0 0
        %735 = vmatpush1.bf16.msra.mxu0 0
        %736 = vmatprep.subr.bf16.mxu0 0
        %737 = vmatpush1.bf16.msra.mxu0 0
        %738 = vmatprep.subr.bf16.mxu0 0
        %739 = vmatpush1.bf16.msra.mxu0 0
        %740 = vmatprep.mubr.bf16.mxu0 0
        %741 = vmatmul.mubr.bf16.gmra.mrb[0].mxu0 %v639
        %v742 = vpop.f32.mrb[0].mxu0
        %v743 = vadd.f32 %v700, %v742
        %v744 = vpop.f32.mrb[0].mxu0
        %v745 = vpop.f32.mrb[0].mxu0
        %v746 = vadd.f32 %v700, %v745
        %v747 = vpop.f32.mrb[0].mxu0
        %748 = vmatprep.mubr.bf16.mxu0 0
        %749 = vmatmul.mubr.bf16.gmra.mrb[0].mxu0 %v642
        %v750 = vpop.f32.mrb[0].mxu0
        %v751 = vadd.f32 %v700, %v750
        %v752 = vpop.f32.mrb[0].mxu0
        %v753 = vpop.f32.mrb[0].mxu0
        %v754 = vadd.f32 %v700, %v753
        %v755 = vpop.f32.mrb[0].mxu0
        %756 = vdwg.mxu0
        %v757 = vmax.f32 %v679, 0.0
        %v758 = vmax.f32 %v682, 0.0
        %v759 = vmax.f32 %v687, 0.0
        %v760 = vmax.f32 %v690, 0.0
        %vm761 = vcmask 261120
        %762 = vst.msk [vmem:[%s370] sm:$0xff] %vm761, %v757
        %763 = vst.msk [vmem:[%s370 + $0x8] sm:$0xff] %vm761, %v758
        %764 = vst.msk [vmem:[%s370 + $0x10] sm:$0xff] %vm761, %v759
        %765 = vst.msk [vmem:[%s370 + $0x18] sm:$0xff] %vm761, %v760
        %v766 = vtanh.pop %v743
        %v767 = vtanh.pop %v746
        %v768 = vtanh.pop %v751
        %v769 = vtanh.pop %v754
        %770 = vst.msk [vmem:[%s377] sm:$0xff] %vm761, %v766
        %771 = vst.msk [vmem:[%s377 + $0x8] sm:$0xff] %vm761, %v767
        %772 = vst.msk [vmem:[%s377 + $0x10] sm:$0xff] %vm761, %v768
        %773 = vst.msk [vmem:[%s377 + $0x18] sm:$0xff] %vm761, %v769
        %s774 = sand.u32 %s193, 1
        %s775 = scalar_lea.sflag [#allocation4], %s774
        %s776 = sand.u32 %s193, 1
        %s777 = smul.addr %s776, 32
        %s778 = scalar_lea.vmem [#allocation8], %s777
        %s779 = sand.u32 %s221, 1
        %s780 = scalar_lea.sflag [#allocation10], %s779
        %s781 = sand.u32 %s221, 1
        %s782 = smul.addr %s781, 32
        %s783 = scalar_lea.vmem [#allocation9], %s782
        // Predicated region
        $region57: #{tpu_custom_call.1} parent=43 // pred_check
          %p784 = pneg %p203
        $region58: #{tpu_custom_call.1} parent=43 // pred_check_branch
          %786 = sbr.rel (%p784) target = $region60
        $region59: #{tpu_custom_call.1} parent=43 // pred_region
          %s787 = smul.u32 4, %s36
          %s789 = ssub.s32 512, 512
          %790 = vsyncadd %s775, %s789
          %s791 = smul.addr %s35, 4
          %s792 = sadd.s32 %s787, %s791
          %s793 = smul.addr %s792, 128
          %s794 = scalar_lea.hbm %s6, %s793
          %s795 = sshll.u32 %s778, 4
          %s796 = int_to_ptr.vmem [resolvable:$true] %s795
          %801 = dma.vmem_to_hbm [thread:$0]  %s796, 512, %s794, %s775, 128, 128, 8
        $region60: #{tpu_custom_call.1} parent=43 // pred_fallthru
          _
        // Predicated region
        $region61: #{tpu_custom_call.1} parent=43 // pred_check
          %p802 = pneg %p231
        $region62: #{tpu_custom_call.1} parent=43 // pred_check_branch
          %804 = sbr.rel (%p802) target = $region64
        $region63: #{tpu_custom_call.1} parent=43 // pred_region
          %s805 = smul.u32 4, %s36
          %s807 = ssub.s32 512, 512
          %808 = vsyncadd %s780, %s807
          %s809 = smul.addr %s35, 4
          %s810 = sadd.s32 %s805, %s809
          %s811 = smul.addr %s810, 128
          %s812 = scalar_lea.hbm %s7, %s811
          %s813 = sshll.u32 %s783, 4
          %s814 = int_to_ptr.vmem [resolvable:$true] %s813
          %819 = dma.vmem_to_hbm [thread:$0]  %s814, 512, %s812, %s780, 128, 128, 8
        $region64: #{tpu_custom_call.1} parent=43 // pred_fallthru
          _
      $region44: #{tpu_custom_call.1} parent=5 // pred_fallthru
        _
      %p820 = scmp.le.s32.totalorder 2, %s26
      // Predicated region
      $region65: #{tpu_custom_call.1} parent=5 // pred_check
        %p821 = pneg %p820
      $region66: #{tpu_custom_call.1} parent=5 // pred_check_branch
        %823 = sbr.rel (%p821) target = $region68
      $region67: #{tpu_custom_call.1} parent=5 // pred_region
        %s824 = ssub.s32 %s26, 2
        // Predicated region
        $region69: #{tpu_custom_call.1} parent=67 // pred_check
          %p825 = pneg %p209
        $region70: #{tpu_custom_call.1} parent=67 // pred_check_branch
          %827 = sbr.rel (%p825) target = $region72
        $region71: #{tpu_custom_call.1} parent=67 // pred_region
          %s828 = sand.u32 %s194, 1
          %s829 = scalar_lea.sflag [#allocation4], %s828
          %s830 = sand.u32 %s194, 1
          %s831 = smul.addr %s830, 32
          %s832 = scalar_lea.vmem [#allocation8], %s831
          %833 = dma.done %s829, 512
        $region72: #{tpu_custom_call.1} parent=67 // pred_fallthru
          _
        // Predicated region
        $region73: #{tpu_custom_call.1} parent=67 // pred_check
          %p834 = pneg %p237
        $region74: #{tpu_custom_call.1} parent=67 // pred_check_branch
          %836 = sbr.rel (%p834) target = $region76
        $region75: #{tpu_custom_call.1} parent=67 // pred_region
          %s837 = sand.u32 %s222, 1
          %s838 = scalar_lea.sflag [#allocation10], %s837
          %s839 = sand.u32 %s222, 1
          %s840 = smul.addr %s839, 32
          %s841 = scalar_lea.vmem [#allocation9], %s840
          %842 = dma.done %s838, 512
        $region76: #{tpu_custom_call.1} parent=67 // pred_fallthru
          _
      $region68: #{tpu_custom_call.1} parent=5 // pred_fallthru
        _
    $region6: #{tpu_custom_call.1} parent=1 // loop_footer
      %s30 = sadd.s32 1, %s26
    $region7: #{tpu_custom_call.1} parent=1 // loop_footer_branch
      %25 = sbr.rel target = $region3
    $region8: #{tpu_custom_call.1} parent=1 // loop_exit
      _
    %843 = vsyncpa [#allocation3], 1
    %s844 = scalar_lea.sflag [#allocation3], 1
    %845 = vsyncpa %s844, 1
    %846 = vsyncpa [#allocation6], 1
    %s847 = scalar_lea.sflag [#allocation6], 1
    %848 = vsyncpa %s847, 1
    %849 = vsyncpa [#allocation4], 1
    %s850 = scalar_lea.sflag [#allocation4], 1
    %851 = vsyncpa %s850, 1
    %852 = vsyncpa [#allocation10], 1
    %s853 = scalar_lea.sflag [#allocation10], 1
    %854 = vsyncpa %s853, 1

</llo_original>
